<compile_context>
chip_gen: v5e
topology: v5e:2x2
jax: 0.10.0
libtpu: 0.0.40
codegen_flags: <defaults>
</compile_context>

<pallas_src>
import jax
import jax.numpy as jnp
from jax.experimental import pallas as pl
from jax.experimental.pallas import tpu as pltpu


def _cls_kernel(x_ref, w_ref, b_ref, wc_ref, feat_ref, cas_ref):
    """One batch element per grid step.

    x_ref:    (1, T, CP)   input sequence (channels lane-padded to CP)
    w_ref:    (3*CP, CP)   fused k=3 conv weight [tap(t-1); tap(t); tap(t+1)]
    b_ref:    (1, CP)      conv bias (f32)
    wc_ref:   (CP, KP)     1x1 classifier weight
    feat_ref: (1, T, CP)   ReLU(conv) output
    cas_ref:  (1, T, KP)   classifier output
    """
    x = x_ref[0]                                  # (T, CP)
    t, _ = x.shape

    # Time index within the sequence (block == one sequence, so no modulo needed).
    row = jax.lax.broadcasted_iota(jnp.int32, (t, 1), 0)
    zeros = jnp.zeros_like(x)

    # x_prev[r] = x[r-1], zero at r==0; x_next[r] = x[r+1], zero at r==T-1.
    x_prev = jnp.where(row == 0, zeros, pltpu.roll(x, shift=1, axis=0))
    x_next = jnp.where(row == t - 1, zeros, pltpu.roll(x, shift=t - 1, axis=0))

    # Fused Conv1d(k=3, pad=1): one (T, 3*CP) x (3*CP, CP) MXU matmul.
    # With CP=128-aligned pieces the concat is on vreg lane boundaries (no relayout).
    xs = jnp.concatenate([x_prev, x, x_next], axis=-1)          # (T, 3*CP)
    cdt = w_ref.dtype                                           # f32, or bf16 opt-in
    conv = jnp.dot(xs.astype(cdt), w_ref[...],
                   preferred_element_type=jnp.float32) + b_ref[...]
    out = jnp.maximum(conv, 0.0)                                # ReLU
    feat_ref[0] = out.astype(feat_ref.dtype)

    # Dropout = identity at inference; classifier = 1x1 conv == matmul (no bias).
    cas = jnp.dot(out.astype(cdt), wc_ref[...],
                  preferred_element_type=jnp.float32)
    cas_ref[0] = cas.astype(cas_ref.dtype)


def cls_module_forward(x_ncw, conv_w, conv_b, cls_w, *, use_bf16=False):
    """
    x_ncw:  (B, C, T)   -- same layout as the PyTorch module input
    conv_w: (C, C, 3)   -- nn.Conv1d(C, C, 3, padding=1) weight (out, in, k)
    conv_b: (C,)        -- its bias
    cls_w:  (K, C, 1)   -- nn.Conv1d(C, K, 1, bias=False) weight
    returns (feat, cas): (B, T, C), (B, T, K)   (matches the PyTorch permutes)
    """
    B, C, T = x_ncw.shape
    K = cls_w.shape[0]
    LANE = 128
    CP = pl.cdiv(C, LANE) * LANE                 # channel lanes padded to 128-multiple
    KP = pl.cdiv(K, LANE) * LANE                 # class lanes padded to 128-multiple

    # (B, C, T) -> (B, T, C): time on sublanes, channels on lanes; lane-pad channels.
    # TODO(synk): fuse this transpose into the input DMA at production sizes.
    x_btc = jnp.transpose(x_ncw, (0, 2, 1))
    x_pad = jnp.pad(x_btc, ((0, 0), (0, 0), (0, CP - C)))

    w_dtype = jnp.bfloat16 if use_bf16 else x_ncw.dtype
    # Conv1d(padding=1): tap k multiplies x[t + k - 1] (k=0 -> x[t-1], 1 -> x[t], 2 -> x[t+1]).
    w_io = jnp.pad(jnp.transpose(conv_w, (1, 0, 2)),             # (in, out, 3)
                   ((0, CP - C), (0, CP - C), (0, 0)))
    w_fused = jnp.concatenate(
        [w_io[:, :, 0], w_io[:, :, 1], w_io[:, :, 2]], axis=0).astype(w_dtype)  # (3CP, CP)
    b = jnp.pad(conv_b, (0, CP - C)).reshape(1, CP).astype(jnp.float32)
    wc = jnp.pad(jnp.transpose(cls_w[:, :, 0]),                  # (C, K) -> (CP, KP)
                 ((0, CP - C), (0, KP - K))).astype(w_dtype)

    wbytes = 2 if use_bf16 else 4
    cost = pl.CostEstimate(
        flops=2 * B * T * (3 * CP * CP + CP * KP),
        transcendentals=0,
        bytes_accessed=4 * B * T * (2 * CP + KP) + wbytes * (3 * CP * CP + CP * KP) + 4 * CP,
    )

    feat_p, cas_p = pl.pallas_call(
        _cls_kernel,
        out_shape=(
            jax.ShapeDtypeStruct((B, T, CP), x_ncw.dtype),
            jax.ShapeDtypeStruct((B, T, KP), x_ncw.dtype),
        ),
        grid=(B,),                                               # one sequence per step
        in_specs=[
            pl.BlockSpec((1, T, CP), lambda i: (i, 0, 0)),       # x (per-sequence block)
            pl.BlockSpec((3 * CP, CP), lambda i: (0, 0)),        # fused conv weight
            pl.BlockSpec((1, CP), lambda i: (0, 0)),             # conv bias
            pl.BlockSpec((CP, KP), lambda i: (0, 0)),            # classifier weight
        ],
        out_specs=(
            pl.BlockSpec((1, T, CP), lambda i: (i, 0, 0)),       # feat (lane-dense)
            pl.BlockSpec((1, T, KP), lambda i: (i, 0, 0)),       # cas  (lane-dense)
        ),
        compiler_params=pltpu.CompilerParams(
            dimension_semantics=("parallel",)),                  # v7x: shard batches over TCs
        cost_estimate=cost,
    )(x_pad, w_fused, b, wc)

    # Slice off lane padding wrapper-side.
    return feat_p[:, :, :C], cas_p[:, :, :K]


def _reference(x_ncw, conv_w, conv_b, cls_w):
    # Pure-JAX reference (same math, no Pallas).
    x_btc = jnp.transpose(x_ncw, (0, 2, 1)).astype(jnp.float32)  # (B, T, C)
    B, T, C = x_btc.shape
    zeros = jnp.zeros((B, 1, C), jnp.float32)
    x_prev = jnp.concatenate([zeros, x_btc[:, :-1]], axis=1)
    x_next = jnp.concatenate([x_btc[:, 1:], zeros], axis=1)
    w0 = jnp.transpose(conv_w[:, :, 0]).astype(jnp.float32)
    w1 = jnp.transpose(conv_w[:, :, 1]).astype(jnp.float32)
    w2 = jnp.transpose(conv_w[:, :, 2]).astype(jnp.float32)
    conv = x_prev @ w0 + x_btc @ w1 + x_next @ w2 + conv_b.reshape(1, 1, C)
    out = jnp.maximum(conv, 0.0)
    cas = out @ jnp.transpose(cls_w[:, :, 0]).astype(jnp.float32)
    return out, cas


if __name__ == "__main__":
    B, C, T = 2, 32, 16          # batch, len_feature, sequence length
    num_classes = 7
    K = num_classes + 1

    key = jax.random.PRNGKey(0)
    k_x, k_w, k_b, k_c = jax.random.split(key, 4)

    x = jax.random.normal(k_x, (B, C, T), dtype=jnp.float32)
    conv_w = jax.random.normal(k_w, (C, C, 3), dtype=jnp.float32) * 0.1
    conv_b = jax.random.normal(k_b, (C,), dtype=jnp.float32) * 0.1
    cls_w = jax.random.normal(k_c, (K, C, 1), dtype=jnp.float32) * 0.1

    feat, cas = jax.jit(cls_module_forward)(x, conv_w, conv_b, cls_w)
    feat = jax.block_until_ready(feat)
    cas = jax.block_until_ready(cas)

    feat_ref, cas_ref = _reference(x, conv_w, conv_b, cls_w)
    assert feat.shape == (B, T, C) and cas.shape == (B, T, K)
    assert jnp.allclose(feat, feat_ref, atol=1e-4, rtol=1e-4)
    assert jnp.allclose(cas, cas_ref, atol=1e-4, rtol=1e-4)

    print("KERNEL_OK")
</pallas_src>

<mosaic_0001>
module attributes {stable_mosaic.version = 11 : i64} {
  func.func @_cls_kernel(%arg0: i32, %arg1: memref<1x16x128xf32, #tpu.memory_space<vmem>>, %arg2: memref<384x128xf32, #tpu.memory_space<vmem>>, %arg3: memref<1x128xf32, #tpu.memory_space<vmem>>, %arg4: memref<128x128xf32, #tpu.memory_space<vmem>>, %arg5: memref<1x16x128xf32, #tpu.memory_space<vmem>>, %arg6: memref<1x16x128xf32, #tpu.memory_space<vmem>>) attributes {dimension_semantics = [#tpu.dimension_semantics<parallel>], iteration_bounds = array<i64: 2>, scalar_prefetch = 0 : i64, scratch_operands = 0 : i64, tpu.core_type = #tpu.core_type<tc>, window_params = [{transform_indices = @transform_0, window_bounds = array<i64: 1, 16, 128>}, {pipeline_mode = #tpu.pipeline_mode<synchronous>, transform_indices = @transform_1, window_bounds = array<i64: 384, 128>}, {pipeline_mode = #tpu.pipeline_mode<synchronous>, transform_indices = @transform_2, window_bounds = array<i64: 1, 128>}, {pipeline_mode = #tpu.pipeline_mode<synchronous>, transform_indices = @transform_3, window_bounds = array<i64: 128, 128>}, {transform_indices = @transform_4, window_bounds = array<i64: 1, 16, 128>}, {transform_indices = @transform_5, window_bounds = array<i64: 1, 16, 128>}]} {
    %c0 = arith.constant 0 : index
    %c0_0 = arith.constant 0 : index
    %c0_1 = arith.constant 0 : index
    %0 = vector.load %arg1[%c0, %c0_0, %c0_1] : memref<1x16x128xf32, #tpu.memory_space<vmem>>, vector<1x16x128xf32>
    %1 = vector.shape_cast %0 : vector<1x16x128xf32> to vector<16x128xf32>
    %2 = tpu.iota {dimensions = array<i32: 0>} : vector<16x1xi32>
    %cst = arith.constant 0.000000e+00 : f32
    %3 = vector.broadcast %cst : f32 to vector<16x128xf32>
    %c0_i32 = arith.constant 0 : i32
    %4 = vector.broadcast %c0_i32 : i32 to vector<16x1xi32>
    %5 = arith.cmpi eq, %2, %4 : vector<16x1xi32>
    %c1_i32 = arith.constant 1 : i32
    %6 = tpu.dynamic_rotate %1 by %c1_i32 dim 0 : vector<16x128xf32>, i32 -> vector<16x128xf32>
    %7 = vector.shape_cast %5 : vector<16x1xi1> to vector<16x1xi1>
    %8 = vector.broadcast %7 : vector<16x1xi1> to vector<16x128xi1>
    %9 = arith.select %8, %3, %6 : vector<16x128xi1>, vector<16x128xf32>
    %c15_i32 = arith.constant 15 : i32
    %10 = vector.broadcast %c15_i32 : i32 to vector<16x1xi32>
    %11 = arith.cmpi eq, %2, %10 : vector<16x1xi32>
    %c15_i32_2 = arith.constant 15 : i32
    %12 = tpu.dynamic_rotate %1 by %c15_i32_2 dim 0 : vector<16x128xf32>, i32 -> vector<16x128xf32>
    %13 = vector.shape_cast %11 : vector<16x1xi1> to vector<16x1xi1>
    %14 = vector.broadcast %13 : vector<16x1xi1> to vector<16x128xi1>
    %15 = arith.select %14, %3, %12 : vector<16x128xi1>, vector<16x128xf32>
    %16 = tpu.concatenate %9, %1, %15 in 1 : vector<16x128xf32>, vector<16x128xf32>, vector<16x128xf32> -> vector<16x384xf32>
    %c0_3 = arith.constant 0 : index
    %c0_4 = arith.constant 0 : index
    %17 = vector.load %arg2[%c0_3, %c0_4] : memref<384x128xf32, #tpu.memory_space<vmem>>, vector<384x128xf32>
    %cst_5 = arith.constant dense<0.000000e+00> : vector<16x128xf32>
    %18 = tpu.matmul %16, %17, %cst_5 {dimension_numbers = #tpu.dot_dimension_numbers<[1], [0], [0], [1], [0, 0, 1, 1], [], []>} : vector<16x384xf32>, vector<384x128xf32>, vector<16x128xf32> -> vector<16x128xf32>
    %c0_6 = arith.constant 0 : index
    %c0_7 = arith.constant 0 : index
    %19 = vector.load %arg3[%c0_6, %c0_7] : memref<1x128xf32, #tpu.memory_space<vmem>>, vector<1x128xf32>
    %20 = vector.broadcast %19 : vector<1x128xf32> to vector<16x128xf32>
    %21 = arith.addf %18, %20 : vector<16x128xf32>
    %cst_8 = arith.constant 0.000000e+00 : f32
    %22 = vector.broadcast %cst_8 : f32 to vector<16x128xf32>
    %23 = arith.maximumf %21, %22 : vector<16x128xf32>
    %c0_9 = arith.constant 0 : index
    %c0_10 = arith.constant 0 : index
    %c0_11 = arith.constant 0 : index
    %24 = vector.load %arg5[%c0_9, %c0_10, %c0_11] : memref<1x16x128xf32, #tpu.memory_space<vmem>>, vector<1x16x128xf32>
    %25 = vector.shape_cast %24 : vector<1x16x128xf32> to vector<16x128xf32>
    %26 = vector.shape_cast %23 : vector<16x128xf32> to vector<1x16x128xf32>
    tpu.vector_store %arg5[%c0_9, %c0_10, %c0_11], %26 {strides = array<i32>} : memref<1x16x128xf32, #tpu.memory_space<vmem>>, vector<1x16x128xf32>,
    %c0_12 = arith.constant 0 : index
    %c0_13 = arith.constant 0 : index
    %27 = vector.load %arg4[%c0_12, %c0_13] : memref<128x128xf32, #tpu.memory_space<vmem>>, vector<128x128xf32>
    %cst_14 = arith.constant dense<0.000000e+00> : vector<16x128xf32>
    %28 = tpu.matmul %23, %27, %cst_14 {dimension_numbers = #tpu.dot_dimension_numbers<[1], [0], [0], [1], [0, 0, 1, 1], [], []>} : vector<16x128xf32>, vector<128x128xf32>, vector<16x128xf32> -> vector<16x128xf32>
    %c0_15 = arith.constant 0 : index
    %c0_16 = arith.constant 0 : index
    %c0_17 = arith.constant 0 : index
    %29 = vector.load %arg6[%c0_15, %c0_16, %c0_17] : memref<1x16x128xf32, #tpu.memory_space<vmem>>, vector<1x16x128xf32>
    %30 = vector.shape_cast %29 : vector<1x16x128xf32> to vector<16x128xf32>
    %31 = vector.shape_cast %28 : vector<16x128xf32> to vector<1x16x128xf32>
    tpu.vector_store %arg6[%c0_15, %c0_16, %c0_17], %31 {strides = array<i32>} : memref<1x16x128xf32, #tpu.memory_space<vmem>>, vector<1x16x128xf32>,
    return
  }
  func.func @transform_0(%arg0: i32) -> (i32, i32, i32) {
    %c0_i32 = arith.constant 0 : i32
    %c0_i32_0 = arith.constant 0 : i32
    %c0_i32_1 = arith.constant 0 : i32
    return %arg0, %c0_i32, %c0_i32_0 : i32, i32, i32
  }
  func.func @transform_1(%arg0: i32) -> (i32, i32) {
    %c0_i32 = arith.constant 0 : i32
    %c0_i32_0 = arith.constant 0 : i32
    %c0_i32_1 = arith.constant 0 : i32
    return %c0_i32, %c0_i32_0 : i32, i32
  }
  func.func @transform_2(%arg0: i32) -> (i32, i32) {
    %c0_i32 = arith.constant 0 : i32
    %c0_i32_0 = arith.constant 0 : i32
    %c0_i32_1 = arith.constant 0 : i32
    return %c0_i32, %c0_i32_0 : i32, i32
  }
  func.func @transform_3(%arg0: i32) -> (i32, i32) {
    %c0_i32 = arith.constant 0 : i32
    %c0_i32_0 = arith.constant 0 : i32
    %c0_i32_1 = arith.constant 0 : i32
    return %c0_i32, %c0_i32_0 : i32, i32
  }
  func.func @transform_4(%arg0: i32) -> (i32, i32, i32) {
    %c0_i32 = arith.constant 0 : i32
    %c0_i32_0 = arith.constant 0 : i32
    %c0_i32_1 = arith.constant 0 : i32
    return %arg0, %c0_i32, %c0_i32_0 : i32, i32, i32
  }
  func.func @transform_5(%arg0: i32) -> (i32, i32, i32) {
    %c0_i32 = arith.constant 0 : i32
    %c0_i32_0 = arith.constant 0 : i32
    %c0_i32_1 = arith.constant 0 : i32
    return %arg0, %c0_i32, %c0_i32_0 : i32, i32, i32
  }
}

</mosaic_0001>

<llo_original>
// kernel: cls_module_forward.1
$region0: #{cls_module_forward.1}
  #allocation0 [shape = 'u32[]', space=smem, size = 0x4, offset = 0x4, fixed_abs, tag = 'smem constant byte address 0x4 - core index']
  #allocation1 [shape = 'u32[72,128]{1,0:T(1,128)}', space=vmem, size = 0x9000, scoped, tag = 'internal scratch']
  %s0 = inlined_call_operand.vmem [shape: f32[2,16,128], index: 0, kind: input, shape index: {}]
  %s1 = inlined_call_operand.vmem [shape: f32[384,128], index: 1, kind: input, shape index: {}]
  %s2 = inlined_call_operand.vmem [shape: f32[1,128], index: 2, kind: input, shape index: {}]
  %s3 = inlined_call_operand.vmem [shape: f32[128,128], index: 3, kind: input, shape index: {}]
  %s4 = inlined_call_operand.hbm [shape: f32[2,16,128], index: 4, kind: output, shape index: {0}]
  %s5 = inlined_call_operand.vmem [shape: f32[2,16,128], index: 5, kind: output, shape index: {1}]
  %6 = xla_tuple %s4, %s5
  %s7 = sld [smem:[#allocation0]]
  $region57: #{cls_module_forward.1} parent=0
    _
  %s9 = ssub.s32 1, %s7
  %s10 = scalar_select 0, %s9, %s7
  $region1: #{cls_module_forward.1} parent=0
    #allocation2 [shape = 'u8[16384]{0}', space=vmem, size = 0x4000, scoped, tag = 'output window, operand 0']
    #allocation3 [shape = 's32[2]{0}', space=sflag, size = 0x8, scoped, tag = 'scoped memory for cls_module_forward.1']
    %11 = vsyncpa [#allocation3], 0
    %s12 = scalar_lea.sflag [#allocation3], 1
    %13 = vsyncpa %s12, 0
    loop: start=0, step=1, limit=4
    $region2: #{cls_module_forward.1} parent=1 // loop_pre_header
      _
    $region3: #{cls_module_forward.1} parent=1 // loop_header
      %s15 = sphi 0, %s19
      %p16 = scmp.ge.s32.totalorder %s15, 4
      %s25 = sphi 0, %s27
      %s28 = sphi 0, %s25
      %s29 = sphi 0, %s28
      %s45 = sphi 0, %s29
      %s49 = sphi 0, %s49
      %s51 = sphi 0, %s49
      %s52 = sphi 0, %s51
      %s66 = sphi 0, %s52
      %s70 = sphi 0, %s70
      %s72 = sphi 0, %s70
      %s73 = sphi 0, %s72
      %s87 = sphi 0, %s73
      %s91 = sphi 0, %s91
      %s93 = sphi 0, %s91
      %s94 = sphi 0, %s93
      %s108 = sphi 0, %s94
      %s114 = sphi 0, %s116
      %s117 = sphi 0, %s114
      %s118 = sphi 0, %s117
      %s134 = sphi 0, %s118
      %s140 = sphi 0, %s142
      %s143 = sphi 0, %s140
      %s144 = sphi 0, %s143
      %s160 = sphi 0, %s144
    $region4: #{cls_module_forward.1} parent=1 // loop_header_branch
      %18 = sbr.rel (%p16) target = $region8
    $region5: #{cls_module_forward.1} parent=1 // loop_body
      %s20 = ssub.s32 %s15, 1
      %s21 = ssub.s32 %s15, 2
      %s22 = sadd.s32 %s15, 1
      %s23 = ssub.s32 %s15, %s22
      %p24 = scmp.eq.s32.totalorder %s23, 0
      %s26 = sadd.s32 %s25, 1
      %s27 = scalar_select %p24, %s25, %s26
      %p30 = pneg %p24
      %p31 = scmp.eq.s32.totalorder %s15, 1
      %p32 = por %p30, %p31
      %p33 = scmp.ne.s32.totalorder %s25, %s28
      %p34 = scmp.eq.s32.totalorder %s15, 0
      %p35 = por %p33, %p34
      %p36 = scmp.ne.s32.totalorder %s25, %s28
      %p37 = scmp.eq.s32.totalorder %s20, 1
      %p38 = por %p36, %p37
      %p39 = scmp.ne.s32.totalorder %s28, %s29
      %p40 = scmp.eq.s32.totalorder %s20, 0
      %p41 = por %p39, %p40
      %p42 = scmp.ne.s32.totalorder %s28, %s29
      %p43 = scmp.eq.s32.totalorder %s21, 1
      %p44 = por %p42, %p43
      %p46 = scmp.ne.s32.totalorder %s29, %s45
      %p47 = scmp.eq.s32.totalorder %s21, 0
      %p48 = por %p46, %p47
      %s50 = sadd.s32 %s49, 1
      %p53 = scmp.eq.s32.totalorder %s15, 1
      %p54 = scmp.ne.s32.totalorder %s49, %s51
      %p55 = scmp.eq.s32.totalorder %s15, 0
      %p56 = por %p54, %p55
      %p57 = scmp.ne.s32.totalorder %s49, %s51
      %p58 = scmp.eq.s32.totalorder %s20, 1
      %p59 = por %p57, %p58
      %p60 = scmp.ne.s32.totalorder %s51, %s52
      %p61 = scmp.eq.s32.totalorder %s20, 0
      %p62 = por %p60, %p61
      %p63 = scmp.ne.s32.totalorder %s51, %s52
      %p64 = scmp.eq.s32.totalorder %s21, 1
      %p65 = por %p63, %p64
      %p67 = scmp.ne.s32.totalorder %s52, %s66
      %p68 = scmp.eq.s32.totalorder %s21, 0
      %p69 = por %p67, %p68
      %s71 = sadd.s32 %s70, 1
      %p74 = scmp.eq.s32.totalorder %s15, 1
      %p75 = scmp.ne.s32.totalorder %s70, %s72
      %p76 = scmp.eq.s32.totalorder %s15, 0
      %p77 = por %p75, %p76
      %p78 = scmp.ne.s32.totalorder %s70, %s72
      %p79 = scmp.eq.s32.totalorder %s20, 1
      %p80 = por %p78, %p79
      %p81 = scmp.ne.s32.totalorder %s72, %s73
      %p82 = scmp.eq.s32.totalorder %s20, 0
      %p83 = por %p81, %p82
      %p84 = scmp.ne.s32.totalorder %s72, %s73
      %p85 = scmp.eq.s32.totalorder %s21, 1
      %p86 = por %p84, %p85
      %p88 = scmp.ne.s32.totalorder %s73, %s87
      %p89 = scmp.eq.s32.totalorder %s21, 0
      %p90 = por %p88, %p89
      %s92 = sadd.s32 %s91, 1
      %p95 = scmp.eq.s32.totalorder %s15, 1
      %p96 = scmp.ne.s32.totalorder %s91, %s93
      %p97 = scmp.eq.s32.totalorder %s15, 0
      %p98 = por %p96, %p97
      %p99 = scmp.ne.s32.totalorder %s91, %s93
      %p100 = scmp.eq.s32.totalorder %s20, 1
      %p101 = por %p99, %p100
      %p102 = scmp.ne.s32.totalorder %s93, %s94
      %p103 = scmp.eq.s32.totalorder %s20, 0
      %p104 = por %p102, %p103
      %p105 = scmp.ne.s32.totalorder %s93, %s94
      %p106 = scmp.eq.s32.totalorder %s21, 1
      %p107 = por %p105, %p106
      %p109 = scmp.ne.s32.totalorder %s94, %s108
      %p110 = scmp.eq.s32.totalorder %s21, 0
      %p111 = por %p109, %p110
      %s112 = ssub.s32 %s15, %s22
      %p113 = scmp.eq.s32.totalorder %s112, 0
      %s115 = sadd.s32 %s114, 1
      %s116 = scalar_select %p113, %s114, %s115
      %p119 = pneg %p113
      %p120 = scmp.eq.s32.totalorder %s15, 1
      %p121 = por %p119, %p120
      %p122 = scmp.ne.s32.totalorder %s114, %s117
      %p123 = scmp.eq.s32.totalorder %s15, 0
      %p124 = por %p122, %p123
      %p125 = scmp.ne.s32.totalorder %s114, %s117
      %p126 = scmp.eq.s32.totalorder %s20, 1
      %p127 = por %p125, %p126
      %p128 = scmp.ne.s32.totalorder %s117, %s118
      %p129 = scmp.eq.s32.totalorder %s20, 0
      %p130 = por %p128, %p129
      %p131 = scmp.ne.s32.totalorder %s117, %s118
      %p132 = scmp.eq.s32.totalorder %s21, 1
      %p133 = por %p131, %p132
      %p135 = scmp.ne.s32.totalorder %s118, %s134
      %p136 = scmp.eq.s32.totalorder %s21, 0
      %p137 = por %p135, %p136
      %s138 = ssub.s32 %s15, %s22
      %p139 = scmp.eq.s32.totalorder %s138, 0
      %s141 = sadd.s32 %s140, 1
      %s142 = scalar_select %p139, %s140, %s141
      %p145 = pneg %p139
      %p146 = scmp.eq.s32.totalorder %s15, 1
      %p147 = por %p145, %p146
      %p148 = scmp.ne.s32.totalorder %s140, %s143
      %p149 = scmp.eq.s32.totalorder %s15, 0
      %p150 = por %p148, %p149
      %p151 = scmp.ne.s32.totalorder %s140, %s143
      %p152 = scmp.eq.s32.totalorder %s20, 1
      %p153 = por %p151, %p152
      %p154 = scmp.ne.s32.totalorder %s143, %s144
      %p155 = scmp.eq.s32.totalorder %s20, 0
      %p156 = por %p154, %p155
      %p157 = scmp.ne.s32.totalorder %s143, %s144
      %p158 = scmp.eq.s32.totalorder %s21, 1
      %p159 = por %p157, %p158
      %p161 = scmp.ne.s32.totalorder %s144, %s160
      %p162 = scmp.eq.s32.totalorder %s21, 0
      %p163 = por %p161, %p162
      %p164 = scmp.le.s32.totalorder 1, %s15
      %p165 = scmp.lt.s32.totalorder %s15, 3
      %p166 = pnand %p164, %p165
      %p167 = pneg %p166
      // Predicated region
      $region9: #{cls_module_forward.1} parent=5 // pred_check
        _
      $region10: #{cls_module_forward.1} parent=5 // pred_check_branch
        %169 = sbr.rel (%p166) target = $region12
      $region11: #{cls_module_forward.1} parent=5 // pred_region
        %s170 = ssub.s32 %s15, 1
        // Predicated region
        $region13: #{cls_module_forward.1} parent=11 // pred_check
          %p171 = pneg %p62
        $region14: #{cls_module_forward.1} parent=11 // pred_check_branch
          %173 = sbr.rel (%p171) target = $region16
        $region15: #{cls_module_forward.1} parent=11 // pred_region
          _
        $region16: #{cls_module_forward.1} parent=11 // pred_fallthru
          _
        // Predicated region
        $region17: #{cls_module_forward.1} parent=11 // pred_check
          %p174 = pneg %p83
        $region18: #{cls_module_forward.1} parent=11 // pred_check_branch
          %176 = sbr.rel (%p174) target = $region20
        $region19: #{cls_module_forward.1} parent=11 // pred_region
          _
        $region20: #{cls_module_forward.1} parent=11 // pred_fallthru
          _
        // Predicated region
        $region21: #{cls_module_forward.1} parent=11 // pred_check
          %p177 = pneg %p104
        $region22: #{cls_module_forward.1} parent=11 // pred_check_branch
          %179 = sbr.rel (%p177) target = $region24
        $region23: #{cls_module_forward.1} parent=11 // pred_region
          _
        $region24: #{cls_module_forward.1} parent=11 // pred_fallthru
          _
      $region12: #{cls_module_forward.1} parent=5 // pred_fallthru
        _
      %p180 = scmp.lt.s32.totalorder %s15, 2
      // Predicated region
      $region25: #{cls_module_forward.1} parent=5 // pred_check
        %p181 = pneg %p180
      $region26: #{cls_module_forward.1} parent=5 // pred_check_branch
        %183 = sbr.rel (%p181) target = $region28
      $region27: #{cls_module_forward.1} parent=5 // pred_region
        // Predicated region
        $region29: #{cls_module_forward.1} parent=27 // pred_check
          %p184 = pneg %p35
        $region30: #{cls_module_forward.1} parent=27 // pred_check_branch
          %186 = sbr.rel (%p184) target = $region32
        $region31: #{cls_module_forward.1} parent=27 // pred_region
          %p187 = scmp.lt.s32.totalorder %s15, 1
          %s188 = scalar_select %p187, %s15, 1
          %s189 = smul.addr %s188, 2
          %s190 = smul.addr %s189, 8
          %s191 = scalar_lea.vmem %s0, %s190
        $region32: #{cls_module_forward.1} parent=27 // pred_fallthru
          _
      $region28: #{cls_module_forward.1} parent=5 // pred_fallthru
        _
      %p192 = scmp.le.s32.totalorder 1, %s15
      %p193 = scmp.lt.s32.totalorder %s15, 3
      %p194 = pnand %p192, %p193
      %p195 = pneg %p194
      // Predicated region
      $region33: #{cls_module_forward.1} parent=5 // pred_check
        _
      $region34: #{cls_module_forward.1} parent=5 // pred_check_branch
        %197 = sbr.rel (%p194) target = $region36
      $region35: #{cls_module_forward.1} parent=5 // pred_region
        %s198 = ssub.s32 %s15, 1
        %p199 = scmp.lt.s32.totalorder %s20, 1
        %s200 = scalar_select %p199, %s20, 1
        %s201 = smul.addr %s200, 2
        %s202 = smul.addr %s201, 8
        %s203 = scalar_lea.vmem %s0, %s202
        %p204 = pneg %p41
        %p205 = pneg %p38
        %p206 = pneg %p62
        %p207 = pneg %p59
        %p208 = pneg %p83
        %p209 = pneg %p80
        %p210 = pneg %p104
        %p211 = pneg %p101
        %p212 = pneg %p130
        %p213 = pneg %p127
        %s214 = sand.u32 %s117, 1
        %s215 = scalar_lea.sflag [#allocation3], %s214
        %s216 = sand.u32 %s117, 1
        %s217 = smul.addr %s216, 16
        %s218 = scalar_lea.vmem [#allocation2], %s217
        %p219 = pneg %p156
        %p220 = pneg %p153
        %p221 = scmp.lt.s32.totalorder %s20, 1
        %s222 = scalar_select %p221, %s20, 1
        %s223 = smul.addr %s222, 2
        %s224 = smul.addr %s223, 8
        %s225 = scalar_lea.vmem %s5, %s224
        %p226 = scmp.lt.s32.totalorder %s20, 1
        %s227 = scalar_select %p226, %s20, 1
        %s228 = smul.addr %s227, 2
        %s229 = smul.addr %s228, 8
        %s230 = scalar_lea.vmem %s0, %s229
        %p231 = scmp.lt.s32.totalorder %s20, 1
        %s232 = scalar_select %p231, %s20, 1
        %s233 = smul.addr %s232, 2
        %s234 = smul.addr %s233, 8
        %s235 = scalar_lea.vmem %s5, %s234
        %v236 = vld [vmem:[%s230] sm:$0xff]
        %v237 = vld [vmem:[%s230 + $0x8] sm:$0xff]
        %v238 = vlaneseq
        %v239 = vshrl.u32 %v238, 7
        %v240 = vadd.s32 %v239, 8
        %vm241 = vcmp.eq.s32.totalorder %v239, 0
        %vm242 = vcmp.eq.s32.totalorder %v240, 0
        %v243 = vrot.slane %v236, 7
        %v244 = vrot.slane %v237, 7
        %vm245 = vcmp.lt.s32.totalorder %v239, 1
        %v246 = vsel %vm245, %v243, %v244
        %v247 = vsel %vm245, %v244, %v243
        %v248 = vsel %vm241, 1, 0
        %v249 = vsel %vm242, 1, 0
        %vm250 = vcmp.eq.s32.totalorder %v248, 1
        %vm251 = vcmp.eq.s32.totalorder %v249, 1
        %v252 = vsel %vm250, 0.0, %v247
        %v253 = vsel %vm251, 0.0, %v246
        %vm254 = vcmp.eq.s32.totalorder %v239, 15
        %vm255 = vcmp.eq.s32.totalorder %v240, 15
        %v256 = vrot.slane %v236, 1
        %v257 = vrot.slane %v237, 1
        %vm258 = vcmp.lt.s32.totalorder %v239, 7
        %v259 = vsel %vm258, %v256, %v257
        %v260 = vsel %vm258, %v257, %v256
        %v261 = vsel %vm254, 1, 0
        %v262 = vsel %vm255, 1, 0
        %vm263 = vcmp.eq.s32.totalorder %v261, 1
        %vm264 = vcmp.eq.s32.totalorder %v262, 1
        %v265 = vsel %vm263, 0.0, %v259
        %v266 = vsel %vm264, 0.0, %v260
        %v267 = vld [vmem:[%s1] sm:$0xff]
        %v268 = vld [vmem:[%s1 + $0x8] sm:$0xff]
        %v269 = vld [vmem:[%s1 + $0x10] sm:$0xff]
        %v270 = vld [vmem:[%s1 + $0x18] sm:$0xff]
        %v271 = vld [vmem:[%s1 + $0x20] sm:$0xff]
        %v272 = vld [vmem:[%s1 + $0x28] sm:$0xff]
        %v273 = vld [vmem:[%s1 + $0x30] sm:$0xff]
        %v274 = vld [vmem:[%s1 + $0x38] sm:$0xff]
        %v275 = vld [vmem:[%s1 + $0x40] sm:$0xff]
        %v276 = vld [vmem:[%s1 + $0x48] sm:$0xff]
        %v277 = vld [vmem:[%s1 + $0x50] sm:$0xff]
        %v278 = vld [vmem:[%s1 + $0x58] sm:$0xff]
        %v279 = vld [vmem:[%s1 + $0x60] sm:$0xff]
        %v280 = vld [vmem:[%s1 + $0x68] sm:$0xff]
        %v281 = vld [vmem:[%s1 + $0x70] sm:$0xff]
        %v282 = vld [vmem:[%s1 + $0x78] sm:$0xff]
        %v283 = vld [vmem:[%s1 + $0x80] sm:$0xff]
        %v284 = vld [vmem:[%s1 + $0x88] sm:$0xff]
        %v285 = vld [vmem:[%s1 + $0x90] sm:$0xff]
        %v286 = vld [vmem:[%s1 + $0x98] sm:$0xff]
        %v287 = vld [vmem:[%s1 + $0xa0] sm:$0xff]
        %v288 = vld [vmem:[%s1 + $0xa8] sm:$0xff]
        %v289 = vld [vmem:[%s1 + $0xb0] sm:$0xff]
        %v290 = vld [vmem:[%s1 + $0xb8] sm:$0xff]
        %v291 = vld [vmem:[%s1 + $0xc0] sm:$0xff]
        %v292 = vld [vmem:[%s1 + $0xc8] sm:$0xff]
        %v293 = vld [vmem:[%s1 + $0xd0] sm:$0xff]
        %v294 = vld [vmem:[%s1 + $0xd8] sm:$0xff]
        %v295 = vld [vmem:[%s1 + $0xe0] sm:$0xff]
        %v296 = vld [vmem:[%s1 + $0xe8] sm:$0xff]
        %v297 = vld [vmem:[%s1 + $0xf0] sm:$0xff]
        %v298 = vld [vmem:[%s1 + $0xf8] sm:$0xff]
        %v299 = vld [vmem:[%s1 + $0x100] sm:$0xff]
        %v300 = vld [vmem:[%s1 + $0x108] sm:$0xff]
        %v301 = vld [vmem:[%s1 + $0x110] sm:$0xff]
        %v302 = vld [vmem:[%s1 + $0x118] sm:$0xff]
        %v303 = vld [vmem:[%s1 + $0x120] sm:$0xff]
        %v304 = vld [vmem:[%s1 + $0x128] sm:$0xff]
        %v305 = vld [vmem:[%s1 + $0x130] sm:$0xff]
        %v306 = vld [vmem:[%s1 + $0x138] sm:$0xff]
        %v307 = vld [vmem:[%s1 + $0x140] sm:$0xff]
        %v308 = vld [vmem:[%s1 + $0x148] sm:$0xff]
        %v309 = vld [vmem:[%s1 + $0x150] sm:$0xff]
        %v310 = vld [vmem:[%s1 + $0x158] sm:$0xff]
        %v311 = vld [vmem:[%s1 + $0x160] sm:$0xff]
        %v312 = vld [vmem:[%s1 + $0x168] sm:$0xff]
        %v313 = vld [vmem:[%s1 + $0x170] sm:$0xff]
        %v314 = vld [vmem:[%s1 + $0x178] sm:$0xff]
        %v315 = vld [vmem:[%s2] sm:$0x1]
        %v317 = vperm.slane %v315, 0
        %319 = vmatpush.msra.mxu0 %v282
        %320 = vmatpush.msra.mxu0 %v281
        %321 = vmatpush.msra.mxu0 %v280
        %322 = vmatpush.msra.mxu0 %v279
        %323 = vmatpush.msra.mxu0 %v278
        %324 = vmatpush.msra.mxu0 %v277
        %325 = vmatpush.msra.mxu0 %v276
        %326 = vmatpush.msra.mxu0 %v275
        %327 = vmatpush.msra.mxu0 %v274
        %328 = vmatpush.msra.mxu0 %v273
        %329 = vmatpush.msra.mxu0 %v272
        %330 = vmatpush.msra.mxu0 %v271
        %331 = vmatpush.msra.mxu0 %v270
        %332 = vmatpush.msra.mxu0 %v269
        %333 = vmatpush.msra.mxu0 %v268
        %334 = vmatpush.msra.mxu0 %v267
        %335 = vmatmul.f32.gmra.mxu0 %v252
        %v336 = vpop.f32.mrf.mxu0
        %v337 = vadd.f32 %v317, %v336
        %338 = vmatmul.f32.gmra.mxu0 %v253
        %v339 = vpop.f32.mrf.mxu0
        %v340 = vadd.f32 %v317, %v339
        %341 = vdwg.mxu0
        %342 = vmatpush.msra.mxu0 %v298
        %343 = vmatpush.msra.mxu0 %v297
        %344 = vmatpush.msra.mxu0 %v296
        %345 = vmatpush.msra.mxu0 %v295
        %346 = vmatpush.msra.mxu0 %v294
        %347 = vmatpush.msra.mxu0 %v293
        %348 = vmatpush.msra.mxu0 %v292
        %349 = vmatpush.msra.mxu0 %v291
        %350 = vmatpush.msra.mxu0 %v290
        %351 = vmatpush.msra.mxu0 %v289
        %352 = vmatpush.msra.mxu0 %v288
        %353 = vmatpush.msra.mxu0 %v287
        %354 = vmatpush.msra.mxu0 %v286
        %355 = vmatpush.msra.mxu0 %v285
        %356 = vmatpush.msra.mxu0 %v284
        %357 = vmatpush.msra.mxu0 %v283
        %358 = vmatmul.f32.gmra.mxu0 %v236
        %v359 = vpop.f32.mrf.mxu0
        %v360 = vadd.f32 %v337, %v359
        %361 = vmatmul.f32.gmra.mxu0 %v237
        %v362 = vpop.f32.mrf.mxu0
        %v363 = vadd.f32 %v340, %v362
        %364 = vdwg.mxu0
        %365 = vmatpush.msra.mxu0 %v314
        %366 = vmatpush.msra.mxu0 %v313
        %367 = vmatpush.msra.mxu0 %v312
        %368 = vmatpush.msra.mxu0 %v311
        %369 = vmatpush.msra.mxu0 %v310
        %370 = vmatpush.msra.mxu0 %v309
        %371 = vmatpush.msra.mxu0 %v308
        %372 = vmatpush.msra.mxu0 %v307
        %373 = vmatpush.msra.mxu0 %v306
        %374 = vmatpush.msra.mxu0 %v305
        %375 = vmatpush.msra.mxu0 %v304
        %376 = vmatpush.msra.mxu0 %v303
        %377 = vmatpush.msra.mxu0 %v302
        %378 = vmatpush.msra.mxu0 %v301
        %379 = vmatpush.msra.mxu0 %v300
        %380 = vmatpush.msra.mxu0 %v299
        %381 = vmatmul.f32.gmra.mxu0 %v265
        %v382 = vpop.f32.mrf.mxu0
        %v383 = vadd.f32 %v360, %v382
        %384 = vmatmul.f32.gmra.mxu0 %v266
        %v385 = vpop.f32.mrf.mxu0
        %v386 = vadd.f32 %v363, %v385
        %387 = vdwg.mxu0
        %v388 = vmax.f32 %v383, 0.0
        %v389 = vmax.f32 %v386, 0.0
        %390 = vst [vmem:[%s218] sm:$0xff] %v388
        %391 = vst [vmem:[%s218 + $0x8] sm:$0xff] %v389
        %v392 = vld [vmem:[%s3] sm:$0xff]
        %v393 = vld [vmem:[%s3 + $0x8] sm:$0xff]
        %v394 = vld [vmem:[%s3 + $0x10] sm:$0xff]
        %v395 = vld [vmem:[%s3 + $0x18] sm:$0xff]
        %v396 = vld [vmem:[%s3 + $0x20] sm:$0xff]
        %v397 = vld [vmem:[%s3 + $0x28] sm:$0xff]
        %v398 = vld [vmem:[%s3 + $0x30] sm:$0xff]
        %v399 = vld [vmem:[%s3 + $0x38] sm:$0xff]
        %v400 = vld [vmem:[%s3 + $0x40] sm:$0xff]
        %v401 = vld [vmem:[%s3 + $0x48] sm:$0xff]
        %v402 = vld [vmem:[%s3 + $0x50] sm:$0xff]
        %v403 = vld [vmem:[%s3 + $0x58] sm:$0xff]
        %v404 = vld [vmem:[%s3 + $0x60] sm:$0xff]
        %v405 = vld [vmem:[%s3 + $0x68] sm:$0xff]
        %v406 = vld [vmem:[%s3 + $0x70] sm:$0xff]
        %v407 = vld [vmem:[%s3 + $0x78] sm:$0xff]
        %408 = vmatpush.msra.mxu0 %v407
        %409 = vmatpush.msra.mxu0 %v406
        %410 = vmatpush.msra.mxu0 %v405
        %411 = vmatpush.msra.mxu0 %v404
        %412 = vmatpush.msra.mxu0 %v403
        %413 = vmatpush.msra.mxu0 %v402
        %414 = vmatpush.msra.mxu0 %v401
        %415 = vmatpush.msra.mxu0 %v400
        %416 = vmatpush.msra.mxu0 %v399
        %417 = vmatpush.msra.mxu0 %v398
        %418 = vmatpush.msra.mxu0 %v397
        %419 = vmatpush.msra.mxu0 %v396
        %420 = vmatpush.msra.mxu0 %v395
        %421 = vmatpush.msra.mxu0 %v394
        %422 = vmatpush.msra.mxu0 %v393
        %423 = vmatpush.msra.mxu0 %v392
        %424 = vmatmul.f32.gmra.mxu0 %v388
        %v425 = vpop.f32.mrf.mxu0
        %v426 = vadd.f32 0.0, %v425
        %427 = vmatmul.f32.gmra.mxu0 %v389
        %v428 = vpop.f32.mrf.mxu0
        %v429 = vadd.f32 0.0, %v428
        %430 = vdwg.mxu0
        %431 = vst [vmem:[%s235] sm:$0xff] %v426
        %432 = vst [vmem:[%s235 + $0x8] sm:$0xff] %v429
        %s433 = sand.u32 %s117, 1
        %s434 = scalar_lea.sflag [#allocation3], %s433
        %s435 = sand.u32 %s117, 1
        %s436 = smul.addr %s435, 16
        %s437 = scalar_lea.vmem [#allocation2], %s436
        %p438 = scmp.lt.s32.totalorder %s20, 1
        %s439 = scalar_select %p438, %s20, 1
        %s440 = smul.addr %s439, 2
        %s441 = smul.addr %s440, 8
        %s442 = scalar_lea.vmem %s5, %s441
        // Predicated region
        $region37: #{cls_module_forward.1} parent=35 // pred_check
          %p443 = pneg %p127
        $region38: #{cls_module_forward.1} parent=35 // pred_check_branch
          %445 = sbr.rel (%p443) target = $region40
        $region39: #{cls_module_forward.1} parent=35 // pred_region
          %447 = vsyncadd %s434, 0
          %s448 = smul.addr %s20, 2
          %s449 = smul.addr %s448, 8
          %s450 = scalar_lea.hbm %s4, %s449
          %s451 = sshll.u32 %s437, 4
          %s452 = int_to_ptr.vmem [resolvable:$true] %s451
          %s453 = sshll.u32 %s450, 4
          %s454 = int_to_ptr.hbm [resolvable:$true] %s453
          %459 = dma.vmem_to_hbm [thread:$0]  %s452, 256, %s454, %s434, 128, 128, 8
        $region40: #{cls_module_forward.1} parent=35 // pred_fallthru
          _
        // Predicated region
        $region41: #{cls_module_forward.1} parent=35 // pred_check
          %p460 = pneg %p153
        $region42: #{cls_module_forward.1} parent=35 // pred_check_branch
          %462 = sbr.rel (%p460) target = $region44
        $region43: #{cls_module_forward.1} parent=35 // pred_region
          _
        $region44: #{cls_module_forward.1} parent=35 // pred_fallthru
          _
      $region36: #{cls_module_forward.1} parent=5 // pred_fallthru
        _
      %p463 = scmp.le.s32.totalorder 2, %s15
      // Predicated region
      $region45: #{cls_module_forward.1} parent=5 // pred_check
        %p464 = pneg %p463
      $region46: #{cls_module_forward.1} parent=5 // pred_check_branch
        %466 = sbr.rel (%p464) target = $region48
      $region47: #{cls_module_forward.1} parent=5 // pred_region
        %s467 = ssub.s32 %s15, 2
        // Predicated region
        $region49: #{cls_module_forward.1} parent=47 // pred_check
          %p468 = pneg %p133
        $region50: #{cls_module_forward.1} parent=47 // pred_check_branch
          %470 = sbr.rel (%p468) target = $region52
        $region51: #{cls_module_forward.1} parent=47 // pred_region
          %s471 = sand.u32 %s118, 1
          %s472 = scalar_lea.sflag [#allocation3], %s471
          %s473 = sand.u32 %s118, 1
          %s474 = smul.addr %s473, 16
          %s475 = scalar_lea.vmem [#allocation2], %s474
          %477 = dma.done %s472, 256
        $region52: #{cls_module_forward.1} parent=47 // pred_fallthru
          _
        // Predicated region
        $region53: #{cls_module_forward.1} parent=47 // pred_check
          %p478 = pneg %p159
        $region54: #{cls_module_forward.1} parent=47 // pred_check_branch
          %480 = sbr.rel (%p478) target = $region56
        $region55: #{cls_module_forward.1} parent=47 // pred_region
          %p481 = scmp.lt.s32.totalorder %s21, 1
          %s482 = scalar_select %p481, %s21, 1
          %s483 = smul.addr %s482, 2
          %s484 = smul.addr %s483, 8
          %s485 = scalar_lea.vmem %s5, %s484
        $region56: #{cls_module_forward.1} parent=47 // pred_fallthru
          _
      $region48: #{cls_module_forward.1} parent=5 // pred_fallthru
        _
    $region6: #{cls_module_forward.1} parent=1 // loop_footer
      %s19 = sadd.s32 1, %s15
    $region7: #{cls_module_forward.1} parent=1 // loop_footer_branch
      %14 = sbr.rel target = $region3
    $region8: #{cls_module_forward.1} parent=1 // loop_exit
      _
    %486 = vsyncpa [#allocation3], 1
    %s487 = scalar_lea.sflag [#allocation3], 1
    %488 = vsyncpa %s487, 1

</llo_original>
